<compile_context>
chip_gen: v7x
topology: tpu7x:2x2x1
jax: 0.10.0
libtpu: 0.0.40
codegen_flags: <defaults>
</compile_context>

<pallas_src>
import functools

import jax
import jax.numpy as jnp
from jax import lax
from jax.experimental import pallas as pl
from jax.experimental.pallas import tpu as pltpu

LANES = 128
TARGET_BLOCK_BYTES = 4 << 20   # per-input per-grid-step block (~4 MiB)
CHUNK_ROWS = 512               # inner-loop chunk: 512x128 f32 = 64 vregs
FAST_PATH_BYTES = 8 << 20      # below ~2 blocks per input: plain XLA is cheaper


def _round_up(v, m):
    return ((v + m - 1) // m) * m


def _charbonnier_kernel(x_ref, y_ref, out_ref, acc_ref, *,
                        eps2, rows_total, tiles_per_core, chunk_rows,
                        needs_mask):
    c = pl.program_id(0)           # megacore split axis ("parallel")
    i = pl.program_id(1)           # per-core tile loop ("arbitrary")
    block_rows = x_ref.shape[0]
    num_chunks = block_rows // chunk_rows

    @pl.when(i == 0)
    def _():
        acc_ref[...] = jnp.zeros_like(acc_ref)

    # First global row covered by this (un-clamped) tile; used for masking.
    tile_row0 = (c * tiles_per_core + i) * block_rows

    def accumulate(off):
        x = x_ref[pl.ds(off, chunk_rows), :].astype(jnp.float32)
        y = y_ref[pl.ds(off, chunk_rows), :].astype(jnp.float32)
        d = x - y
        term = jnp.sqrt(d * d + jnp.float32(eps2))
        if needs_mask:
            row = (tile_row0 + off
                   + lax.broadcasted_iota(jnp.int32, term.shape, 0))
            term = jnp.where(row < rows_total, term, jnp.float32(0.0))
        # Tree-sum the chunk into the small resident accumulator (VPU adds).
        acc_ref[...] += term.reshape(-1, 8, LANES).sum(axis=0)

    if num_chunks == 1:
        accumulate(0)
    else:
        @pl.loop(0, num_chunks)
        def _(j):
            accumulate(pl.multiple_of(j * chunk_rows, chunk_rows))

    @pl.when(i == pl.num_programs(1) - 1)
    def _():
        # One-time cross-lane/sublane reduce -> per-core scalar partial (SMEM).
        out_ref[0, 0] = jnp.sum(acc_ref[...])


def charbonnier_loss(x, y, eps=1e-3, *, use_pallas=None, max_block_rows=None):
    """mean(sqrt((x - y)**2 + eps**2)) over all elements (CharbonnierLoss)."""
    assert x.shape == y.shape, (x.shape, y.shape)
    n = x.size
    eps2 = float(eps) * float(eps)

    def charb(a, b):
        d = a.astype(jnp.float32) - b.astype(jnp.float32)
        return jnp.sqrt(d * d + jnp.float32(eps2))

    isx = x.dtype.itemsize
    isy = y.dtype.itemsize
    gran = max(8, 32 // min(isx, isy))      # sublane packing: 8/16/32 rows
    rows = n // LANES                       # bulk rows handled by the kernel
    rem = n - rows * LANES                  # <128 leftover elements -> JAX

    if use_pallas is None:
        use_pallas = n * max(isx, isy) > FAST_PATH_BYTES
    if (not use_pallas) or rows < gran:
        # Small-n fast path: a single fused XLA elementwise+reduce.
        return jnp.mean(charb(x.reshape(-1), y.reshape(-1)))

    xf = x.reshape(-1)
    yf = y.reshape(-1)

    # --- tile sizing ---------------------------------------------------------
    limit = (max_block_rows if max_block_rows is not None
             else TARGET_BLOCK_BYTES // (LANES * max(isx, isy)))
    if limit > CHUNK_ROWS:
        limit = (limit // CHUNK_ROWS) * CHUNK_ROWS
    limit = max(gran, (limit // gran) * gran)

    block_rows = min(limit, (rows // gran) * gran)      # never exceeds rows
    if block_rows > CHUNK_ROWS:
        block_rows = (block_rows // CHUNK_ROWS) * CHUNK_ROWS
    chunk_rows = min(block_rows, CHUNK_ROWS)

    num_tiles = pl.cdiv(rows, block_rows)
    # v7x megacore: always use both TensorCores when there is >1 tile.  Odd
    # tile counts get one clamped duplicate tile that the row mask zeroes out.
    split = 2 if num_tiles >= 2 else 1
    tiles_per_core = pl.cdiv(num_tiles, split)
    needs_mask = (rows % block_rows != 0) or (split * tiles_per_core != num_tiles)
    last_tile = num_tiles - 1

    if split * tiles_per_core == num_tiles:
        in_map = lambda c, i: (c * tiles_per_core + i, 0)
    else:  # clamp the extra (duplicate) tile onto the last real tile
        in_map = lambda c, i: (jnp.minimum(c * tiles_per_core + i, last_tile), 0)

    # Bulk view.  When n % 128 == 0 this is a pure bitcast reshape (no copy);
    # otherwise XLA materializes the prefix slice (rare) -- the expensive
    # full-array jnp.pad of both inputs is gone in every case.
    if rem:
        x2d = xf[: rows * LANES].reshape(rows, LANES)
        y2d = yf[: rows * LANES].reshape(rows, LANES)
    else:
        x2d = xf.reshape(rows, LANES)
        y2d = yf.reshape(rows, LANES)

    # Raise the scoped-VMEM limit only when the double-buffered input blocks
    # actually need it (large-block config on v5e's 16 MiB default).
    inbuf_bytes = 2 * block_rows * LANES * (isx + isy)
    vmem_limit = None
    if inbuf_bytes > (12 << 20):
        vmem_limit = min(40 << 20, inbuf_bytes + (8 << 20))

    kernel = functools.partial(
        _charbonnier_kernel, eps2=eps2, rows_total=rows,
        tiles_per_core=tiles_per_core, chunk_rows=chunk_rows,
        needs_mask=needs_mask)

    partials = pl.pallas_call(
        kernel,
        out_shape=jax.ShapeDtypeStruct((split, 1), jnp.float32),
        grid=(split, tiles_per_core),
        in_specs=[
            pl.BlockSpec((block_rows, LANES), in_map),
            pl.BlockSpec((block_rows, LANES), in_map),
        ],
        out_specs=pl.BlockSpec((1, 1), lambda c, i: (c, 0),
                               memory_space=pltpu.MemorySpace.SMEM),
        scratch_shapes=[pltpu.VMEM((8, LANES), jnp.float32)],
        compiler_params=pltpu.CompilerParams(
            dimension_semantics=("parallel", "arbitrary"),
            vmem_limit_bytes=vmem_limit),
    )(x2d, y2d)

    total = jnp.sum(partials)                 # `split` scalar partials
    if rem:
        total = total + jnp.sum(charb(xf[rows * LANES:], yf[rows * LANES:]))
    return total / jnp.float32(n)


if __name__ == "__main__":
    key = jax.random.PRNGKey(0)
    kx, ky = jax.random.split(key)
    eps = 1e-3

    def ref_loss(a, b):
        d = a.astype(jnp.float32) - b.astype(jnp.float32)
        return jnp.mean(jnp.sqrt(d * d + jnp.float32(eps * eps)))

    def check(out, a, b):
        out = jax.block_until_ready(out)
        ref = ref_loss(a, b)
        assert jnp.allclose(out, ref, rtol=1e-5, atol=1e-6), (out, ref)

    # 1) Module-typical small NCHW shape; default path (small-n fast path).
    x = jax.random.normal(kx, (2, 4, 16, 16), dtype=jnp.float32)
    y = jax.random.normal(ky, (2, 4, 16, 16), dtype=jnp.float32)
    check(charbonnier_loss(x, y, eps=eps), x, y)

    # 2) Same shape, Pallas kernel forced: single clean tile, no masking.
    check(charbonnier_loss(x, y, eps=eps, use_pallas=True), x, y)

    # 3) Misaligned n: partial boundary tile + row mask + <128-elem JAX tail,
    #    two tiles -> megacore split (block shrunk so a small shape multi-tiles).
    x3 = jax.random.normal(kx, (2, 3, 17, 19), dtype=jnp.float32)
    y3 = jax.random.normal(ky, (2, 3, 17, 19), dtype=jnp.float32)
    check(charbonnier_loss(x3, y3, eps=eps, use_pallas=True, max_block_rows=8),
          x3, y3)

    # 4) Odd tile count: clamped duplicate tile fully masked out (both cores busy).
    x4 = jax.random.normal(kx, (2, 5, 16, 32), dtype=jnp.float32)
    y4 = jax.random.normal(ky, (2, 5, 16, 32), dtype=jnp.float32)
    check(charbonnier_loss(x4, y4, eps=eps, use_pallas=True, max_block_rows=16),
          x4, y4)

    # 5) bf16 inputs: 16-row packed-sublane granularity, in-kernel f32 cast.
    x5 = jax.random.normal(kx, (2, 4, 16, 24), dtype=jnp.float32).astype(jnp.bfloat16)
    y5 = jax.random.normal(ky, (2, 4, 16, 24), dtype=jnp.float32).astype(jnp.bfloat16)
    check(charbonnier_loss(x5, y5, eps=eps, use_pallas=True, max_block_rows=16),
          x5, y5)

    # 6) Larger shape exercising the inner pl.loop (multi-chunk block),
    #    two tiles and a masked partial boundary tile with default sizing.
    x6 = jax.random.normal(kx, (2, 4, 128, 144), dtype=jnp.float32)
    y6 = jax.random.normal(ky, (2, 4, 128, 144), dtype=jnp.float32)
    check(charbonnier_loss(x6, y6, eps=eps, use_pallas=True), x6, y6)

    print("KERNEL_OK")
</pallas_src>

<mosaic_0001>
module attributes {stable_mosaic.version = 11 : i64} {
  func.func @_charbonnier_kernel(%arg0: i32, %arg1: i32, %arg2: memref<16x128xf32, #tpu.memory_space<vmem>>, %arg3: memref<16x128xf32, #tpu.memory_space<vmem>>, %arg4: memref<1x1xf32, #tpu.memory_space<smem>>, %arg5: memref<8x128xf32, #tpu.memory_space<vmem>>) attributes {dimension_semantics = [#tpu.dimension_semantics<parallel>, #tpu.dimension_semantics<arbitrary>], iteration_bounds = array<i64: 1, 1>, scalar_prefetch = 0 : i64, scratch_operands = 1 : i64, tpu.core_type = #tpu.core_type<tc>, window_params = [{transform_indices = @transform_0, window_bounds = array<i64: 16, 128>}, {transform_indices = @transform_1, window_bounds = array<i64: 16, 128>}, {transform_indices = @transform_2, window_bounds = array<i64: 1, 1>}]} {
    %c0_i32 = arith.constant 0 : i32
    %0 = arith.cmpi eq, %arg1, %c0_i32 : i32
    %1 = arith.extui %0 : i1 to i32
    %c0_i32_0 = arith.constant 0 : i32
    %2 = arith.cmpi ne, %1, %c0_i32_0 : i32
    scf.if %2 {
      %cst_11 = arith.constant 0.000000e+00 : f32
      %18 = vector.broadcast %cst_11 : f32 to vector<8x128xf32>
      %c0_12 = arith.constant 0 : index
      %c0_13 = arith.constant 0 : index
      %19 = vector.load %arg5[%c0_12, %c0_13] : memref<8x128xf32, #tpu.memory_space<vmem>>, vector<8x128xf32>
      tpu.vector_store %arg5[%c0_12, %c0_13], %18 {strides = array<i32>} : memref<8x128xf32, #tpu.memory_space<vmem>>, vector<8x128xf32>,
    } else {
    }
    %c0 = arith.constant 0 : index
    %c0_1 = arith.constant 0 : index
    %3 = vector.load %arg2[%c0, %c0_1] : memref<16x128xf32, #tpu.memory_space<vmem>>, vector<16x128xf32>
    %c0_2 = arith.constant 0 : index
    %c0_3 = arith.constant 0 : index
    %4 = vector.load %arg3[%c0_2, %c0_3] : memref<16x128xf32, #tpu.memory_space<vmem>>, vector<16x128xf32>
    %5 = arith.subf %3, %4 : vector<16x128xf32>
    %6 = arith.mulf %5, %5 : vector<16x128xf32>
    %cst = arith.constant 9.99999997E-7 : f32
    %7 = vector.broadcast %cst : f32 to vector<16x128xf32>
    %8 = arith.addf %6, %7 : vector<16x128xf32>
    %9 = math.sqrt %8 : vector<16x128xf32>
    %c0_4 = arith.constant 0 : index
    %c0_5 = arith.constant 0 : index
    %10 = vector.load %arg5[%c0_4, %c0_5] : memref<8x128xf32, #tpu.memory_space<vmem>>, vector<8x128xf32>
    %11 = vector.shape_cast %9 : vector<16x128xf32> to vector<2x8x128xf32>
    %cst_6 = arith.constant dense<0.000000e+00> : vector<8x128xf32>
    %12 = vector.multi_reduction <add>, %11, %cst_6 [0] : vector<2x8x128xf32> to vector<8x128xf32>
    %13 = arith.addf %10, %12 : vector<8x128xf32>
    %c0_7 = arith.constant 0 : index
    %c0_8 = arith.constant 0 : index
    %14 = vector.load %arg5[%c0_7, %c0_8] : memref<8x128xf32, #tpu.memory_space<vmem>>, vector<8x128xf32>
    tpu.vector_store %arg5[%c0_7, %c0_8], %13 {strides = array<i32>} : memref<8x128xf32, #tpu.memory_space<vmem>>, vector<8x128xf32>,
    %c0_i32_9 = arith.constant 0 : i32
    %15 = arith.cmpi eq, %arg1, %c0_i32_9 : i32
    %16 = arith.extui %15 : i1 to i32
    %c0_i32_10 = arith.constant 0 : i32
    %17 = arith.cmpi ne, %16, %c0_i32_10 : i32
    scf.if %17 {
      %c0_11 = arith.constant 0 : index
      %c0_12 = arith.constant 0 : index
      %18 = vector.load %arg5[%c0_11, %c0_12] : memref<8x128xf32, #tpu.memory_space<vmem>>, vector<8x128xf32>
      %19 = vector.shape_cast %18 : vector<8x128xf32> to vector<1x8x128xf32>
      %cst_13 = arith.constant dense<0.000000e+00> : vector<1xf32>
      %20 = vector.multi_reduction <add>, %19, %cst_13 [1, 2] : vector<1x8x128xf32> to vector<1xf32>
      %21 = vector.shape_cast %20 : vector<1xf32> to vector<1x1x1xf32>
      %22 = vector.extract %21[0, 0, 0] : f32 from vector<1x1x1xf32>
      %c0_14 = arith.constant 0 : index
      %c0_15 = arith.constant 0 : index
      %23 = memref.load %arg4[%c0_14, %c0_15] : memref<1x1xf32, #tpu.memory_space<smem>>
      memref.store %22, %arg4[%c0_14, %c0_15] : memref<1x1xf32, #tpu.memory_space<smem>>
    } else {
    }
    return
  }
  func.func @transform_0(%arg0: i32, %arg1: i32) -> (i32, i32) {
    %c1_i32 = arith.constant 1 : i32
    %0 = arith.muli %arg0, %c1_i32 : i32
    %1 = arith.addi %0, %arg1 : i32
    %c0_i32 = arith.constant 0 : i32
    %c0_i32_0 = arith.constant 0 : i32
    return %1, %c0_i32 : i32, i32
  }
  func.func @transform_1(%arg0: i32, %arg1: i32) -> (i32, i32) {
    %c1_i32 = arith.constant 1 : i32
    %0 = arith.muli %arg0, %c1_i32 : i32
    %1 = arith.addi %0, %arg1 : i32
    %c0_i32 = arith.constant 0 : i32
    %c0_i32_0 = arith.constant 0 : i32
    return %1, %c0_i32 : i32, i32
  }
  func.func @transform_2(%arg0: i32, %arg1: i32) -> (i32, i32) {
    %c0_i32 = arith.constant 0 : i32
    %c0_i32_0 = arith.constant 0 : i32
    return %arg0, %c0_i32 : i32, i32
  }
}

</mosaic_0001>

<llo_original>
// kernel: tpu_custom_call.1
$region0: #{tpu_custom_call.1}
  #allocation0 [shape = 'u32[]', space=smem, size = 0x4, offset = 0x4, fixed_abs, tag = 'smem constant byte address 0x4 - core index']
  #allocation1 [shape = 'u32[144,128]{1,0:T(1,128)}', space=vmem, size = 0x12000, scoped, tag = 'internal scratch']
  #allocation2 [shape = 'f32[8,128]{1,0:T(8,128)}', space=vmem, size = 0x1000, scoped, tag = 'scratch operand']
  %s0 = inlined_call_operand.hbm [shape: f32[16,128], index: 0, kind: input, shape index: {}]
  %s1 = inlined_call_operand.hbm [shape: f32[16,128], index: 1, kind: input, shape index: {}]
  %s2 = inlined_call_operand.hbm [shape: f32[1,1], index: 2, kind: output, shape index: {}]
  %s3 = sld [smem:[#allocation0]]
  $region34: #{tpu_custom_call.1} parent=0
    _
  %s5 = ssub.s32 1, %s3
  %s6 = scalar_select 0, %s5, %s3
  $region1: #{tpu_custom_call.1} parent=0
    #allocation3 [shape = 'u8[8192]{0}', space=vmem, size = 0x2000, scoped, tag = 'input window, operand 0, single buffered']
    #allocation4 [shape = 's32[1]{0}', space=sflag, size = 0x4, scoped, tag = 'scoped memory for tpu_custom_call.1']
    #allocation5 [shape = 's32[1]{0}', space=sflag, size = 0x4, scoped, tag = 'scoped memory for tpu_custom_call.1']
    #allocation6 [shape = 'u8[8192]{0}', space=vmem, size = 0x2000, scoped, tag = 'input window, operand 1, single buffered']
    #allocation7 [shape = 's32[1]{0}', space=sflag, size = 0x4, scoped, tag = 'scoped memory for tpu_custom_call.1']
    #allocation8 [shape = 'u8[512]{0}', space=smem, size = 0x200, scoped, tag = 'output window, operand 0, single buffered']
    %7 = vsyncpa [#allocation4], 0
    %8 = vsyncpa [#allocation7], 0
    %9 = vsyncpa [#allocation5], 0
    // Predicated region
    $region2: #{tpu_custom_call.1} parent=1 // pred_check
      _
    $region3: #{tpu_custom_call.1} parent=1 // pred_check_branch
      %11 = sbr.rel (0) target = $region5
    $region4: #{tpu_custom_call.1} parent=1 // pred_region
      %s12 = sadd.s32 0, 0
      %s13 = smul.u32 2, %s12
      %s15 = ssub.s32 256, 256
      %16 = vsyncadd [#allocation4], %s15
      %s17 = smul.addr %s13, 128
      %s18 = scalar_lea.hbm %s0, %s17
      %s19 = sshll.u32 [#allocation3], 4
      %s20 = int_to_ptr.vmem [resolvable:$true] %s19
      %25 = dma.hbm_to_vmem [thread:$0]  %s18, 256, %s20, [#allocation4], 128, 128, 8
    $region5: #{tpu_custom_call.1} parent=1 // pred_fallthru
      _
    // Predicated region
    $region6: #{tpu_custom_call.1} parent=1 // pred_check
      _
    $region7: #{tpu_custom_call.1} parent=1 // pred_check_branch
      %27 = sbr.rel (0) target = $region9
    $region8: #{tpu_custom_call.1} parent=1 // pred_region
      %s28 = sadd.s32 0, 0
      %s29 = smul.u32 2, %s28
      %s31 = ssub.s32 256, 256
      %32 = vsyncadd [#allocation7], %s31
      %s33 = smul.addr %s29, 128
      %s34 = scalar_lea.hbm %s1, %s33
      %s35 = sshll.u32 [#allocation6], 4
      %s36 = int_to_ptr.vmem [resolvable:$true] %s35
      %41 = dma.hbm_to_vmem [thread:$0]  %s34, 256, %s36, [#allocation7], 128, 128, 8
    $region9: #{tpu_custom_call.1} parent=1 // pred_fallthru
      _
    // Predicated region
    $region10: #{tpu_custom_call.1} parent=1 // pred_check
      _
    $region11: #{tpu_custom_call.1} parent=1 // pred_check_branch
      %43 = sbr.rel (0) target = $region13
    $region12: #{tpu_custom_call.1} parent=1 // pred_region
      %44 = dma.done [#allocation4], 256
    $region13: #{tpu_custom_call.1} parent=1 // pred_fallthru
      _
    // Predicated region
    $region14: #{tpu_custom_call.1} parent=1 // pred_check
      _
    $region15: #{tpu_custom_call.1} parent=1 // pred_check_branch
      %46 = sbr.rel (0) target = $region17
    $region16: #{tpu_custom_call.1} parent=1 // pred_region
      %47 = dma.done [#allocation7], 256
    $region17: #{tpu_custom_call.1} parent=1 // pred_fallthru
      _
    %s48 = sadd.s32 0, 0
    %s49 = smul.u32 2, %s48
    %s50 = sadd.s32 0, 0
    %s51 = smul.u32 2, %s50
    %p52 = scmp.eq.s32.totalorder 0, 0
    // Predicated region
    $region18: #{tpu_custom_call.1} parent=1 // pred_check
      %p53 = pneg %p52
    $region19: #{tpu_custom_call.1} parent=1 // pred_check_branch
      %55 = sbr.rel (%p53) target = $region21
    $region20: #{tpu_custom_call.1} parent=1 // pred_region
      %56 = vst [vmem:[#allocation2] sm:$0xff] 0.0
    $region21: #{tpu_custom_call.1} parent=1 // pred_fallthru
      _
    %v57 = vld [vmem:[#allocation3] sm:$0xff]
    %v58 = vld [vmem:[#allocation3 + $0x8] sm:$0xff]
    %v59 = vld [vmem:[#allocation6] sm:$0xff]
    %v60 = vld [vmem:[#allocation6 + $0x8] sm:$0xff]
    %v61 = vsub.f32 %v57, %v59
    %v62 = vsub.f32 %v58, %v60
    %v63 = vmul.f32 %v61, %v61
    %v64 = vmul.f32 %v62, %v62
    %v65 = vadd.f32 %v63, 1e-06
    %v66 = vadd.f32 %v64, 1e-06
    %v67 = vrsqrt.pop %v65
    %v68 = vmul.f32 %v65, %v67
    %vm69 = vcmp.eq.f32.partialorder %v65, inf
    %v70 = vsel %vm69, %v65, %v68
    %vm71 = vcmp.eq.f32.partialorder %v65, 0.0
    %v72 = vand.u32 %v65, 2147483648
    %v73 = vsel %vm71, %v72, %v70
    %v74 = vrsqrt.pop %v66
    %v75 = vmul.f32 %v66, %v74
    %vm76 = vcmp.eq.f32.partialorder %v66, inf
    %v77 = vsel %vm76, %v66, %v75
    %vm78 = vcmp.eq.f32.partialorder %v66, 0.0
    %v79 = vand.u32 %v66, 2147483648
    %v80 = vsel %vm78, %v79, %v77
    %v81 = vld [vmem:[#allocation2] sm:$0xff]
    %v82 = vadd.f32 %v73, %v80
    %v83 = vadd.f32 %v81, %v82
    %84 = vst [vmem:[#allocation2] sm:$0xff] %v83
    // Predicated region
    $region22: #{tpu_custom_call.1} parent=1 // pred_check
      %p85 = pneg %p52
    $region23: #{tpu_custom_call.1} parent=1 // pred_check_branch
      %87 = sbr.rel (%p85) target = $region25
    $region24: #{tpu_custom_call.1} parent=1 // pred_region
      %v88 = vld [vmem:[#allocation2] sm:$0xff]
      %89 = vadd.xlane.f32.xlu0 %v88
      %v90 = vpop.xlane.xlu0 %89
      %v91 = vrot.slane %v90, 4
      %v92 = vadd.f32 %v90, %v91
      %v93 = vrot.slane %v92, 2
      %v94 = vadd.f32 %v92, %v93
      %v95 = vrot.slane %v94, 1
      %v96 = vadd.f32 %v94, %v95
      %s97 = vtos %v96
      %s98 = scalar_lea.smem [#allocation8], 0
      %99 = sst [smem:[%s98]] %s97
    $region25: #{tpu_custom_call.1} parent=1 // pred_fallthru
      _
    // Predicated region
    $region26: #{tpu_custom_call.1} parent=1 // pred_check
      _
    $region27: #{tpu_custom_call.1} parent=1 // pred_check_branch
      %101 = sbr.rel (0) target = $region29
    $region28: #{tpu_custom_call.1} parent=1 // pred_region
      %s103 = ssub.s32 16, 16
      %104 = vsyncadd [#allocation5], %s103
      %107 = dma.smem_to_hbm [#allocation8], 16, %s2, [#allocation5]
    $region29: #{tpu_custom_call.1} parent=1 // pred_fallthru
      _
    // Predicated region
    $region30: #{tpu_custom_call.1} parent=1 // pred_check
      _
    $region31: #{tpu_custom_call.1} parent=1 // pred_check_branch
      %109 = sbr.rel (0) target = $region33
    $region32: #{tpu_custom_call.1} parent=1 // pred_region
      %110 = dma.done [#allocation5], 16
    $region33: #{tpu_custom_call.1} parent=1 // pred_fallthru
      _
    %111 = sfence
    %112 = vsyncpa [#allocation4], 1
    %113 = vsyncpa [#allocation7], 1
    %114 = vsyncpa [#allocation5], 1

</llo_original>
